<compile_context>
chip_gen: v5e
topology: v5e:2x2
jax: 0.10.0
libtpu: 0.0.40
codegen_flags: <defaults>
</compile_context>

<pallas_src>
import jax
import jax.numpy as jnp
from jax.experimental import pallas as pl
from jax.experimental.pallas import tpu as pltpu

# Model hyper-parameters (from the PyTorch module)
BATCH_SIZE = 1
EMBEDDING_SIZE = 10
HIDDEN_SIZE = 5
INPUT_SIZE = 5          # vocab size for the embedding
NUM_CLASSES = 5
NUM_LAYERS = 1
SEQUENCE_LENGTH = 6

# Constant-slab layout (single (32, 128) f32 array, sublane-aligned rows)
SLAB_ROWS = 32
SLAB_COLS = 128
ROW_TABLE = 0    # rows 0:5,  cols 0:5  -> table_proj = emb_table @ W_ih^T + b_rnn
ROW_WHH = 8      # rows 8:13, cols 0:5  -> W_hh^T
ROW_WFC = 16     # rows 16:21, cols 0:5 -> W_fc^T
ROW_BFC = 24     # row 24,    cols 0:5  -> b_fc


def rnn_fused_kernel(ids_ref, slab_ref, out_ref):
    """Fused embedding-gather + tanh-RNN(6 steps) + Linear head, batch=1.

    ids_ref:  (SEQ, 1)            int32 token ids
    slab_ref: (SLAB_ROWS, 128)    f32   packed constants (see layout above)
    out_ref:  (SEQ, NUM_CLASSES)  f32
    """
    # ---- Carve the packed constant slab (static, sublane-aligned views) ----
    table_proj = slab_ref[ROW_TABLE:ROW_TABLE + INPUT_SIZE, 0:HIDDEN_SIZE]   # (VOCAB, HID)
    w_hh_t = slab_ref[ROW_WHH:ROW_WHH + HIDDEN_SIZE, 0:HIDDEN_SIZE]          # (HID, HID)
    w_fc_t = slab_ref[ROW_WFC:ROW_WFC + HIDDEN_SIZE, 0:NUM_CLASSES]          # (HID, CLS)
    b_fc = slab_ref[ROW_BFC:ROW_BFC + 1, 0:NUM_CLASSES]                      # (1, CLS)

    # ---- Embedding gather + input projection + bias in ONE matmul ----------
    # (table_proj already contains emb_table @ W_ih^T + (b_ih + b_hh);
    #  each one-hot row has exactly one 1, so the broadcast bias is exact.)
    ids = ids_ref[...]                                                       # (SEQ, 1)
    col = jax.lax.broadcasted_iota(jnp.int32, (SEQUENCE_LENGTH, INPUT_SIZE), 1)
    onehot = (ids == col).astype(jnp.float32)                                # (SEQ, VOCAB)
    x_proj = jnp.dot(onehot, table_proj,
                     preferred_element_type=jnp.float32)                     # (SEQ, HID)

    # ---- Recurrence: h_t = tanh(x_proj[t] + h_{t-1} @ W_hh^T) --------------
    # Hidden rows stay in registers; no VMEM scratch round-trip.
    h = jnp.zeros((1, HIDDEN_SIZE), jnp.float32)                             # h_0 = 0
    hs = []
    for t in range(SEQUENCE_LENGTH):                                         # fully unrolled (static)
        pre = x_proj[t:t + 1, :] + jnp.dot(h, w_hh_t,
                                           preferred_element_type=jnp.float32)
        h = jnp.tanh(pre)                                                    # (1, HID)
        hs.append(h)
    h_all = jnp.concatenate(hs, axis=0)                                      # (SEQ, HID)

    # ---- Fused fc head: one matmul + bias + ONE store -----------------------
    out_ref[...] = (jnp.dot(h_all, w_fc_t, preferred_element_type=jnp.float32)
                    + b_fc).astype(out_ref.dtype)


def prepare_params(params):
    """One-time constant prep: fold embedding @ W_ih^T + (b_ih + b_hh) and pack
    all kernel constants into a single (32, 128) f32 VMEM slab."""
    emb = params["embedding"].astype(jnp.float32)            # (VOCAB, EMB)
    w_ih = params["w_ih"].astype(jnp.float32)                # (HID, EMB)
    w_hh = params["w_hh"].astype(jnp.float32)                # (HID, HID)
    b_rnn = (params["b_ih"] + params["b_hh"]).astype(jnp.float32)  # (1, HID)
    w_fc = params["w_fc"].astype(jnp.float32)                # (CLS, HID)
    b_fc = params["b_fc"].astype(jnp.float32)                # (1, CLS)

    table_proj = emb @ w_ih.T + b_rnn                        # (VOCAB, HID)

    slab = jnp.zeros((SLAB_ROWS, SLAB_COLS), jnp.float32)
    slab = slab.at[ROW_TABLE:ROW_TABLE + INPUT_SIZE, 0:HIDDEN_SIZE].set(table_proj)
    slab = slab.at[ROW_WHH:ROW_WHH + HIDDEN_SIZE, 0:HIDDEN_SIZE].set(w_hh.T)
    slab = slab.at[ROW_WFC:ROW_WFC + HIDDEN_SIZE, 0:NUM_CLASSES].set(w_fc.T)
    slab = slab.at[ROW_BFC:ROW_BFC + 1, 0:NUM_CLASSES].set(b_fc)
    return {"slab": slab}


def model_forward(x, kparams):
    """x: int32 [BATCH_SIZE, SEQUENCE_LENGTH] token indices.
    kparams: output of prepare_params. Returns (SEQ*BATCH, NUM_CLASSES)."""
    ids = x.reshape(BATCH_SIZE * SEQUENCE_LENGTH, 1).astype(jnp.int32)  # (SEQ, 1)
    vmem = pltpu.MemorySpace.VMEM
    out = pl.pallas_call(
        rnn_fused_kernel,
        out_shape=jax.ShapeDtypeStruct((SEQUENCE_LENGTH, NUM_CLASSES), jnp.float32),
        in_specs=[pl.BlockSpec(memory_space=vmem),
                  pl.BlockSpec(memory_space=vmem)],
        out_specs=pl.BlockSpec(memory_space=vmem),
    )(ids, kparams["slab"])
    return out  # (SEQUENCE_LENGTH, NUM_CLASSES) == PyTorch output (6, 5)


def init_params(key):
    """Deterministic parameter init with shapes matching the PyTorch module."""
    ks = jax.random.split(key, 7)
    k_rnn = 1.0 / jnp.sqrt(HIDDEN_SIZE)
    k_fc = 1.0 / jnp.sqrt(HIDDEN_SIZE)
    return {
        # nn.Embedding(INPUT_SIZE, EMBEDDING_SIZE): N(0, 1)
        "embedding": jax.random.normal(ks[0], (INPUT_SIZE, EMBEDDING_SIZE), jnp.float32),
        # nn.RNN(EMBEDDING_SIZE, HIDDEN_SIZE): U(-1/sqrt(H), 1/sqrt(H))
        "w_ih": jax.random.uniform(ks[1], (HIDDEN_SIZE, EMBEDDING_SIZE), jnp.float32, -k_rnn, k_rnn),
        "w_hh": jax.random.uniform(ks[2], (HIDDEN_SIZE, HIDDEN_SIZE), jnp.float32, -k_rnn, k_rnn),
        "b_ih": jax.random.uniform(ks[3], (1, HIDDEN_SIZE), jnp.float32, -k_rnn, k_rnn),
        "b_hh": jax.random.uniform(ks[4], (1, HIDDEN_SIZE), jnp.float32, -k_rnn, k_rnn),
        # nn.Linear(HIDDEN_SIZE, NUM_CLASSES)
        "w_fc": jax.random.uniform(ks[5], (NUM_CLASSES, HIDDEN_SIZE), jnp.float32, -k_fc, k_fc),
        "b_fc": jax.random.uniform(ks[6], (1, NUM_CLASSES), jnp.float32, -k_fc, k_fc),
    }


def _reference_forward(x, params):
    """Pure-JAX reference of the PyTorch forward, for a correctness check."""
    emb = jnp.take(params["embedding"], x.reshape(-1), axis=0)
    emb = emb.reshape(BATCH_SIZE, SEQUENCE_LENGTH, EMBEDDING_SIZE)
    h = jnp.zeros((BATCH_SIZE, HIDDEN_SIZE), jnp.float32)
    outs = []
    for t in range(SEQUENCE_LENGTH):
        h = jnp.tanh(emb[:, t, :] @ params["w_ih"].T + params["b_ih"]
                     + h @ params["w_hh"].T + params["b_hh"])
        outs.append(h)
    out = jnp.stack(outs, axis=1).reshape(-1, HIDDEN_SIZE)
    return out @ params["w_fc"].T + params["b_fc"]


if __name__ == "__main__":
    key = jax.random.PRNGKey(0)
    k_params, k_x = jax.random.split(key)
    params = init_params(k_params)
    kparams = prepare_params(params)   # one-time constant fold + slab pack

    # Input: token indices in [0, INPUT_SIZE), shape (batch=1, seq=6)
    x = jax.random.randint(k_x, (BATCH_SIZE, SEQUENCE_LENGTH), 0, INPUT_SIZE, dtype=jnp.int32)

    out = model_forward(x, kparams)
    out = jax.block_until_ready(out)

    ref = _reference_forward(x, params)
    assert out.shape == (BATCH_SIZE * SEQUENCE_LENGTH, NUM_CLASSES)
    assert jnp.allclose(out, ref, atol=1e-5, rtol=1e-5), "mismatch vs. reference"

    print("KERNEL_OK")
</pallas_src>

<mosaic_0001>
module attributes {stable_mosaic.version = 11 : i64} {
  func.func @rnn_fused_kernel(%arg0: memref<6x1xi32, #tpu.memory_space<vmem>>, %arg1: memref<32x128xf32, #tpu.memory_space<vmem>>, %arg2: memref<6x5xf32, #tpu.memory_space<vmem>>) attributes {dimension_semantics = [], scalar_prefetch = 0 : i64, scratch_operands = 0 : i64, tpu.core_type = #tpu.core_type<tc>} {
    %c0 = arith.constant 0 : index
    %c0_0 = arith.constant 0 : index
    %0 = vector.load %arg1[%c0, %c0_0] : memref<32x128xf32, #tpu.memory_space<vmem>>, vector<5x5xf32>
    %c8 = arith.constant 8 : index
    %c0_1 = arith.constant 0 : index
    %1 = vector.load %arg1[%c8, %c0_1] : memref<32x128xf32, #tpu.memory_space<vmem>>, vector<5x5xf32>
    %c16 = arith.constant 16 : index
    %c0_2 = arith.constant 0 : index
    %2 = vector.load %arg1[%c16, %c0_2] : memref<32x128xf32, #tpu.memory_space<vmem>>, vector<5x5xf32>
    %c24 = arith.constant 24 : index
    %c0_3 = arith.constant 0 : index
    %3 = vector.load %arg1[%c24, %c0_3] : memref<32x128xf32, #tpu.memory_space<vmem>>, vector<1x5xf32>
    %c0_4 = arith.constant 0 : index
    %c0_5 = arith.constant 0 : index
    %4 = vector.load %arg0[%c0_4, %c0_5] : memref<6x1xi32, #tpu.memory_space<vmem>>, vector<6x1xi32>
    %5 = tpu.iota {dimensions = array<i32: 1>} : vector<6x5xi32>
    %6 = vector.broadcast %4 : vector<6x1xi32> to vector<6x5xi32>
    %7 = arith.cmpi eq, %6, %5 : vector<6x5xi32>
    %8 = arith.extui %7 : vector<6x5xi1> to vector<6x5xi32>
    %9 = arith.sitofp %8 : vector<6x5xi32> to vector<6x5xf32>
    %cst = arith.constant dense<0.000000e+00> : vector<6x5xf32>
    %10 = tpu.matmul %9, %0, %cst {dimension_numbers = #tpu.dot_dimension_numbers<[1], [0], [0], [1], [0, 0, 1, 1], [], []>} : vector<6x5xf32>, vector<5x5xf32>, vector<6x5xf32> -> vector<6x5xf32>
    %cst_6 = arith.constant 0.000000e+00 : f32
    %11 = vector.broadcast %cst_6 : f32 to vector<1x5xf32>
    %12 = vector.extract_strided_slice %10 {offsets = [0, 0], sizes = [1, 5], strides = [1, 1]} : vector<6x5xf32> to vector<1x5xf32>
    %cst_7 = arith.constant dense<0.000000e+00> : vector<1x5xf32>
    %13 = tpu.matmul %11, %1, %cst_7 {dimension_numbers = #tpu.dot_dimension_numbers<[1], [0], [0], [1], [0, 0, 1, 1], [], []>} : vector<1x5xf32>, vector<5x5xf32>, vector<1x5xf32> -> vector<1x5xf32>
    %14 = arith.addf %12, %13 : vector<1x5xf32>
    %15 = math.tanh %14 : vector<1x5xf32>
    %16 = vector.extract_strided_slice %10 {offsets = [1, 0], sizes = [1, 5], strides = [1, 1]} : vector<6x5xf32> to vector<1x5xf32>
    %cst_8 = arith.constant dense<0.000000e+00> : vector<1x5xf32>
    %17 = tpu.matmul %15, %1, %cst_8 {dimension_numbers = #tpu.dot_dimension_numbers<[1], [0], [0], [1], [0, 0, 1, 1], [], []>} : vector<1x5xf32>, vector<5x5xf32>, vector<1x5xf32> -> vector<1x5xf32>
    %18 = arith.addf %16, %17 : vector<1x5xf32>
    %19 = math.tanh %18 : vector<1x5xf32>
    %20 = vector.extract_strided_slice %10 {offsets = [2, 0], sizes = [1, 5], strides = [1, 1]} : vector<6x5xf32> to vector<1x5xf32>
    %cst_9 = arith.constant dense<0.000000e+00> : vector<1x5xf32>
    %21 = tpu.matmul %19, %1, %cst_9 {dimension_numbers = #tpu.dot_dimension_numbers<[1], [0], [0], [1], [0, 0, 1, 1], [], []>} : vector<1x5xf32>, vector<5x5xf32>, vector<1x5xf32> -> vector<1x5xf32>
    %22 = arith.addf %20, %21 : vector<1x5xf32>
    %23 = math.tanh %22 : vector<1x5xf32>
    %24 = vector.extract_strided_slice %10 {offsets = [3, 0], sizes = [1, 5], strides = [1, 1]} : vector<6x5xf32> to vector<1x5xf32>
    %cst_10 = arith.constant dense<0.000000e+00> : vector<1x5xf32>
    %25 = tpu.matmul %23, %1, %cst_10 {dimension_numbers = #tpu.dot_dimension_numbers<[1], [0], [0], [1], [0, 0, 1, 1], [], []>} : vector<1x5xf32>, vector<5x5xf32>, vector<1x5xf32> -> vector<1x5xf32>
    %26 = arith.addf %24, %25 : vector<1x5xf32>
    %27 = math.tanh %26 : vector<1x5xf32>
    %28 = vector.extract_strided_slice %10 {offsets = [4, 0], sizes = [1, 5], strides = [1, 1]} : vector<6x5xf32> to vector<1x5xf32>
    %cst_11 = arith.constant dense<0.000000e+00> : vector<1x5xf32>
    %29 = tpu.matmul %27, %1, %cst_11 {dimension_numbers = #tpu.dot_dimension_numbers<[1], [0], [0], [1], [0, 0, 1, 1], [], []>} : vector<1x5xf32>, vector<5x5xf32>, vector<1x5xf32> -> vector<1x5xf32>
    %30 = arith.addf %28, %29 : vector<1x5xf32>
    %31 = math.tanh %30 : vector<1x5xf32>
    %32 = vector.extract_strided_slice %10 {offsets = [5, 0], sizes = [1, 5], strides = [1, 1]} : vector<6x5xf32> to vector<1x5xf32>
    %cst_12 = arith.constant dense<0.000000e+00> : vector<1x5xf32>
    %33 = tpu.matmul %31, %1, %cst_12 {dimension_numbers = #tpu.dot_dimension_numbers<[1], [0], [0], [1], [0, 0, 1, 1], [], []>} : vector<1x5xf32>, vector<5x5xf32>, vector<1x5xf32> -> vector<1x5xf32>
    %34 = arith.addf %32, %33 : vector<1x5xf32>
    %35 = math.tanh %34 : vector<1x5xf32>
    %36 = tpu.concatenate %15, %19, %23, %27, %31, %35 in 0 : vector<1x5xf32>, vector<1x5xf32>, vector<1x5xf32>, vector<1x5xf32>, vector<1x5xf32>, vector<1x5xf32> -> vector<6x5xf32>
    %cst_13 = arith.constant dense<0.000000e+00> : vector<6x5xf32>
    %37 = tpu.matmul %36, %2, %cst_13 {dimension_numbers = #tpu.dot_dimension_numbers<[1], [0], [0], [1], [0, 0, 1, 1], [], []>} : vector<6x5xf32>, vector<5x5xf32>, vector<6x5xf32> -> vector<6x5xf32>
    %38 = vector.broadcast %3 : vector<1x5xf32> to vector<6x5xf32>
    %39 = arith.addf %37, %38 : vector<6x5xf32>
    %c0_14 = arith.constant 0 : index
    %c0_15 = arith.constant 0 : index
    %40 = vector.load %arg2[%c0_14, %c0_15] : memref<6x5xf32, #tpu.memory_space<vmem>>, vector<6x5xf32>
    tpu.vector_store %arg2[%c0_14, %c0_15], %39 {strides = array<i32>} : memref<6x5xf32, #tpu.memory_space<vmem>>, vector<6x5xf32>,
    return
  }
}

</mosaic_0001>

<llo_original>
// kernel: tpu_custom_call.1
$region0: #{tpu_custom_call.1}
  #allocation0 [shape = 'u32[]', space=smem, size = 0x4, offset = 0x4, fixed_abs, tag = 'smem constant byte address 0x4 - core index']
  #allocation1 [shape = 'u32[72,128]{1,0:T(1,128)}', space=vmem, size = 0x9000, scoped, tag = 'internal scratch']
  %s0 = inlined_call_operand.vmem [shape: s32[6,1], index: 0, kind: input, shape index: {}]
  %s1 = inlined_call_operand.hbm [shape: f32[32,128], index: 1, kind: input, shape index: {}]
  %s2 = inlined_call_operand.hbm [shape: f32[6,5], index: 2, kind: output, shape index: {}]
  %s3 = sld [smem:[#allocation0]]
  $region22: #{tpu_custom_call.1} parent=0
    _
  %s5 = ssub.s32 1, %s3
  %s6 = scalar_select 0, %s5, %s3
  $region1: #{tpu_custom_call.1} parent=0
    #allocation2 [shape = 'u8[16384]{0}', space=vmem, size = 0x4000, scoped, tag = 'input window, operand 1, single buffered']
    #allocation3 [shape = 's32[1]{0}', space=sflag, size = 0x4, scoped, tag = 'scoped memory for tpu_custom_call.1']
    #allocation4 [shape = 's32[1]{0}', space=sflag, size = 0x4, scoped, tag = 'scoped memory for tpu_custom_call.1']
    #allocation5 [shape = 'u8[4096]{0}', space=vmem, size = 0x1000, scoped, tag = 'output window, operand 0, single buffered']
    %7 = vsyncpa [#allocation3], 0
    %8 = vsyncpa [#allocation4], 0
    // Predicated region
    $region2: #{tpu_custom_call.1} parent=1 // pred_check
      _
    $region3: #{tpu_custom_call.1} parent=1 // pred_check_branch
      %10 = sbr.rel (0) target = $region5
    $region4: #{tpu_custom_call.1} parent=1 // pred_region
      _
    $region5: #{tpu_custom_call.1} parent=1 // pred_fallthru
      _
    // Predicated region
    $region6: #{tpu_custom_call.1} parent=1 // pred_check
      _
    $region7: #{tpu_custom_call.1} parent=1 // pred_check_branch
      %12 = sbr.rel (0) target = $region9
    $region8: #{tpu_custom_call.1} parent=1 // pred_region
      %14 = vsyncadd [#allocation3], 0
      %s15 = sshll.u32 %s1, 4
      %s16 = int_to_ptr.hbm [resolvable:$true] %s15
      %s17 = sshll.u32 [#allocation2], 4
      %s18 = int_to_ptr.vmem [resolvable:$true] %s17
      %23 = dma.hbm_to_vmem [thread:$0]  %s16, 512, %s18, [#allocation3], 128, 128, 8
    $region9: #{tpu_custom_call.1} parent=1 // pred_fallthru
      _
    // Predicated region
    $region10: #{tpu_custom_call.1} parent=1 // pred_check
      _
    $region11: #{tpu_custom_call.1} parent=1 // pred_check_branch
      %25 = sbr.rel (0) target = $region13
    $region12: #{tpu_custom_call.1} parent=1 // pred_region
      %27 = dma.done [#allocation3], 512
    $region13: #{tpu_custom_call.1} parent=1 // pred_fallthru
      _
    %v28 = vld [vmem:[#allocation2] sm:$0x1f]
    %v29 = vld [vmem:[#allocation2 + $0x8] sm:$0x1f]
    %v30 = vld [vmem:[#allocation2 + $0x10] sm:$0x1f]
    %v31 = vld [vmem:[#allocation2 + $0x18] sm:$0x1]
    %v32 = vld [vmem:[%s0] sm:$0x3f]
    %v33 = vlaneseq
    %v34 = vand.u32 %v33, 127
    %35 = vset.pattern.permute.xlu0 0
    %36 = vperm.xlu0 %35, %v32
    %v37 = vpop.permute.xlu0 %36
    %vm38 = vcmp.eq.s32.totalorder %v37, %v34
    %v39 = vsel %vm38, 1, 0
    %v40 = vcvt.s32.f32 %v39
    %vm41 = vcmask 39936
    %v43 = vsel %vm41, %v40, 0
    %vm45 = vcmask 1044480
    %v47 = vsel %vm45, %v28, 0
    %49 = vmatpush.msra.mxu0 0.0
    %50 = vmatpush.msra.mxu0 0.0
    %51 = vmatpush.msra.mxu0 0.0
    %52 = vmatpush.msra.mxu0 0.0
    %53 = vmatpush.msra.mxu0 0.0
    %54 = vmatpush.msra.mxu0 0.0
    %55 = vmatpush.msra.mxu0 0.0
    %56 = vmatpush.msra.mxu0 0.0
    %57 = vmatpush.msra.mxu0 0.0
    %58 = vmatpush.msra.mxu0 0.0
    %59 = vmatpush.msra.mxu0 0.0
    %60 = vmatpush.msra.mxu0 0.0
    %61 = vmatpush.msra.mxu0 0.0
    %62 = vmatpush.msra.mxu0 0.0
    %63 = vmatpush.msra.mxu0 0.0
    %64 = vmatpush.msra.mxu0 %v47
    %65 = vmatmul.f32.gmra.mxu0 %v43
    %v66 = vpop.f32.mrf.mxu0
    %v67 = vadd.f32 0.0, %v66
    %68 = vdwg.mxu0
    %v70 = vsel %vm41, 0.0, 0
    %v73 = vsel %vm45, %v29, 0
    %75 = vmatpush.msra.mxu0 0.0
    %76 = vmatpush.msra.mxu0 0.0
    %77 = vmatpush.msra.mxu0 0.0
    %78 = vmatpush.msra.mxu0 0.0
    %79 = vmatpush.msra.mxu0 0.0
    %80 = vmatpush.msra.mxu0 0.0
    %81 = vmatpush.msra.mxu0 0.0
    %82 = vmatpush.msra.mxu0 0.0
    %83 = vmatpush.msra.mxu0 0.0
    %84 = vmatpush.msra.mxu0 0.0
    %85 = vmatpush.msra.mxu0 0.0
    %86 = vmatpush.msra.mxu0 0.0
    %87 = vmatpush.msra.mxu0 0.0
    %88 = vmatpush.msra.mxu0 0.0
    %89 = vmatpush.msra.mxu0 0.0
    %90 = vmatpush.msra.mxu0 %v73
    %91 = vmatmul.f32.gmra.mxu0 %v70
    %v92 = vpop.f32.mrf.mxu0
    %v93 = vadd.f32 0.0, %v92
    %94 = vdwg.mxu0
    %v95 = vadd.f32 %v67, %v93
    %v96 = vtanh.pop %v95
    %v98 = vsel %vm41, %v96, 0
    %100 = vmatpush.msra.mxu0 0.0
    %101 = vmatpush.msra.mxu0 0.0
    %102 = vmatpush.msra.mxu0 0.0
    %103 = vmatpush.msra.mxu0 0.0
    %104 = vmatpush.msra.mxu0 0.0
    %105 = vmatpush.msra.mxu0 0.0
    %106 = vmatpush.msra.mxu0 0.0
    %107 = vmatpush.msra.mxu0 0.0
    %108 = vmatpush.msra.mxu0 0.0
    %109 = vmatpush.msra.mxu0 0.0
    %110 = vmatpush.msra.mxu0 0.0
    %111 = vmatpush.msra.mxu0 0.0
    %112 = vmatpush.msra.mxu0 0.0
    %113 = vmatpush.msra.mxu0 0.0
    %114 = vmatpush.msra.mxu0 0.0
    %115 = vmatpush.msra.mxu0 %v73
    %116 = vmatmul.f32.gmra.mxu0 %v98
    %v117 = vpop.f32.mrf.mxu0
    %v118 = vadd.f32 0.0, %v117
    %119 = vdwg.mxu0
    %v121 = vrot.slane %v118, 7
    %v123 = vadd.f32 %v67, %v121
    %v124 = vtanh.pop %v123
    %v126 = vrot.slane %v124, 1
    %v127 = vsel %vm41, %v126, 0
    %129 = vmatpush.msra.mxu0 0.0
    %130 = vmatpush.msra.mxu0 0.0
    %131 = vmatpush.msra.mxu0 0.0
    %132 = vmatpush.msra.mxu0 0.0
    %133 = vmatpush.msra.mxu0 0.0
    %134 = vmatpush.msra.mxu0 0.0
    %135 = vmatpush.msra.mxu0 0.0
    %136 = vmatpush.msra.mxu0 0.0
    %137 = vmatpush.msra.mxu0 0.0
    %138 = vmatpush.msra.mxu0 0.0
    %139 = vmatpush.msra.mxu0 0.0
    %140 = vmatpush.msra.mxu0 0.0
    %141 = vmatpush.msra.mxu0 0.0
    %142 = vmatpush.msra.mxu0 0.0
    %143 = vmatpush.msra.mxu0 0.0
    %144 = vmatpush.msra.mxu0 %v73
    %145 = vmatmul.f32.gmra.mxu0 %v127
    %v146 = vpop.f32.mrf.mxu0
    %v147 = vadd.f32 0.0, %v146
    %148 = vdwg.mxu0
    %v150 = vrot.slane %v147, 6
    %v152 = vadd.f32 %v67, %v150
    %v153 = vtanh.pop %v152
    %v155 = vrot.slane %v153, 2
    %v156 = vsel %vm41, %v155, 0
    %158 = vmatpush.msra.mxu0 0.0
    %159 = vmatpush.msra.mxu0 0.0
    %160 = vmatpush.msra.mxu0 0.0
    %161 = vmatpush.msra.mxu0 0.0
    %162 = vmatpush.msra.mxu0 0.0
    %163 = vmatpush.msra.mxu0 0.0
    %164 = vmatpush.msra.mxu0 0.0
    %165 = vmatpush.msra.mxu0 0.0
    %166 = vmatpush.msra.mxu0 0.0
    %167 = vmatpush.msra.mxu0 0.0
    %168 = vmatpush.msra.mxu0 0.0
    %169 = vmatpush.msra.mxu0 0.0
    %170 = vmatpush.msra.mxu0 0.0
    %171 = vmatpush.msra.mxu0 0.0
    %172 = vmatpush.msra.mxu0 0.0
    %173 = vmatpush.msra.mxu0 %v73
    %174 = vmatmul.f32.gmra.mxu0 %v156
    %v175 = vpop.f32.mrf.mxu0
    %v176 = vadd.f32 0.0, %v175
    %177 = vdwg.mxu0
    %v179 = vrot.slane %v176, 5
    %v181 = vadd.f32 %v67, %v179
    %v182 = vtanh.pop %v181
    %v184 = vrot.slane %v182, 3
    %v185 = vsel %vm41, %v184, 0
    %187 = vmatpush.msra.mxu0 0.0
    %188 = vmatpush.msra.mxu0 0.0
    %189 = vmatpush.msra.mxu0 0.0
    %190 = vmatpush.msra.mxu0 0.0
    %191 = vmatpush.msra.mxu0 0.0
    %192 = vmatpush.msra.mxu0 0.0
    %193 = vmatpush.msra.mxu0 0.0
    %194 = vmatpush.msra.mxu0 0.0
    %195 = vmatpush.msra.mxu0 0.0
    %196 = vmatpush.msra.mxu0 0.0
    %197 = vmatpush.msra.mxu0 0.0
    %198 = vmatpush.msra.mxu0 0.0
    %199 = vmatpush.msra.mxu0 0.0
    %200 = vmatpush.msra.mxu0 0.0
    %201 = vmatpush.msra.mxu0 0.0
    %202 = vmatpush.msra.mxu0 %v73
    %203 = vmatmul.f32.gmra.mxu0 %v185
    %v204 = vpop.f32.mrf.mxu0
    %v205 = vadd.f32 0.0, %v204
    %206 = vdwg.mxu0
    %v208 = vrot.slane %v205, 4
    %v210 = vadd.f32 %v67, %v208
    %v211 = vtanh.pop %v210
    %v213 = vrot.slane %v211, 4
    %v214 = vsel %vm41, %v213, 0
    %216 = vmatpush.msra.mxu0 0.0
    %217 = vmatpush.msra.mxu0 0.0
    %218 = vmatpush.msra.mxu0 0.0
    %219 = vmatpush.msra.mxu0 0.0
    %220 = vmatpush.msra.mxu0 0.0
    %221 = vmatpush.msra.mxu0 0.0
    %222 = vmatpush.msra.mxu0 0.0
    %223 = vmatpush.msra.mxu0 0.0
    %224 = vmatpush.msra.mxu0 0.0
    %225 = vmatpush.msra.mxu0 0.0
    %226 = vmatpush.msra.mxu0 0.0
    %227 = vmatpush.msra.mxu0 0.0
    %228 = vmatpush.msra.mxu0 0.0
    %229 = vmatpush.msra.mxu0 0.0
    %230 = vmatpush.msra.mxu0 0.0
    %231 = vmatpush.msra.mxu0 %v73
    %232 = vmatmul.f32.gmra.mxu0 %v214
    %v233 = vpop.f32.mrf.mxu0
    %v234 = vadd.f32 0.0, %v233
    %235 = vdwg.mxu0
    %v237 = vrot.slane %v234, 3
    %v239 = vadd.f32 %v67, %v237
    %v240 = vtanh.pop %v239
    %vm241 = vcmask 1040384
    %v242 = vsel %vm241, %v96, %v124
    %vm243 = vcmask 1041408
    %v244 = vsel %vm243, %v242, %v153
    %vm245 = vcmask 1042432
    %v246 = vsel %vm245, %v244, %v182
    %vm247 = vcmask 1043456
    %v248 = vsel %vm247, %v246, %v211
    %v249 = vsel %vm45, %v248, %v240
    %v250 = vperm.slane %v31, 0
    %v252 = vsel %vm41, %v249, 0
    %v255 = vsel %vm45, %v30, 0
    %257 = vmatpush.msra.mxu0 0.0
    %258 = vmatpush.msra.mxu0 0.0
    %259 = vmatpush.msra.mxu0 0.0
    %260 = vmatpush.msra.mxu0 0.0
    %261 = vmatpush.msra.mxu0 0.0
    %262 = vmatpush.msra.mxu0 0.0
    %263 = vmatpush.msra.mxu0 0.0
    %264 = vmatpush.msra.mxu0 0.0
    %265 = vmatpush.msra.mxu0 0.0
    %266 = vmatpush.msra.mxu0 0.0
    %267 = vmatpush.msra.mxu0 0.0
    %268 = vmatpush.msra.mxu0 0.0
    %269 = vmatpush.msra.mxu0 0.0
    %270 = vmatpush.msra.mxu0 0.0
    %271 = vmatpush.msra.mxu0 0.0
    %272 = vmatpush.msra.mxu0 %v255
    %273 = vmatmul.f32.gmra.mxu0 %v252
    %v274 = vpop.f32.mrf.mxu0
    %v275 = vadd.f32 %v250, %v274
    %276 = vdwg.mxu0
    %vm277 = vcmask 37888
    %278 = vst.msk [vmem:[#allocation5] sm:$0x3f] %vm277, %v275
    // Predicated region
    $region14: #{tpu_custom_call.1} parent=1 // pred_check
      _
    $region15: #{tpu_custom_call.1} parent=1 // pred_check_branch
      %280 = sbr.rel (0) target = $region17
    $region16: #{tpu_custom_call.1} parent=1 // pred_region
      %282 = vsyncadd [#allocation4], 0
      %s284 = sshll.u32 [#allocation5], 4
      %s285 = int_to_ptr.vmem [resolvable:$true] %s284
      %s286 = sshll.u32 %s2, 4
      %s287 = int_to_ptr.hbm [resolvable:$true] %s286
      %289 = dma.vmem_to_hbm [thread:$0]  %s285, 128, %s287, [#allocation4]
    $region17: #{tpu_custom_call.1} parent=1 // pred_fallthru
      _
    // Predicated region
    $region18: #{tpu_custom_call.1} parent=1 // pred_check
      _
    $region19: #{tpu_custom_call.1} parent=1 // pred_check_branch
      %291 = sbr.rel (0) target = $region21
    $region20: #{tpu_custom_call.1} parent=1 // pred_region
      %293 = dma.done [#allocation4], 128
    $region21: #{tpu_custom_call.1} parent=1 // pred_fallthru
      _
    %294 = vsyncpa [#allocation3], 1
    %295 = vsyncpa [#allocation4], 1

</llo_original>
